<compile_context>
chip_gen: v5e
topology: v5e:2x2
jax: 0.10.0
libtpu: 0.0.40
codegen_flags: <defaults>
</compile_context>

<pallas_src>
import math

import jax
import jax.numpy as jnp
from jax.experimental import pallas as pl
from jax.experimental.pallas import tpu as pltpu


def _embed_kernel(feat_ref, ids_ref, add_ref, w_ref, emb_ref, o_ref):
    # feat_ref: (1, TL, K)        compute dtype; K = 3*c_in + temporal_size
    # ids_ref : (1, TL, 1)        int32 sequence ids
    # add_ref : (TL, Dp)          pe + conv bias + linear bias (prefolded)
    # w_ref   : (K, Dp)           stacked [conv W_{t-1}; W_t; W_{t+1}; lin W]
    # emb_ref : (seq_num, Dp)     embedding table
    # o_ref   : (1, TL, Dp)
    feats = feat_ref[0]                                      # (TL, K)

    # Fused circular-Conv1d + temporal-Linear projection: one MXU matmul.
    acc = jnp.dot(feats, w_ref[...], preferred_element_type=jnp.float32)

    # seqid_embedding: in-kernel one-hot (VPU iota compare) @ table (MXU);
    # only an int32 id stream is read from HBM.
    tl = feats.shape[0]
    seq_num = emb_ref.shape[0]
    iota = jax.lax.broadcasted_iota(jnp.int32, (tl, seq_num), 1)
    one_hot = (iota == ids_ref[0]).astype(emb_ref.dtype)     # (TL, seq_num)
    acc = acc + jnp.dot(one_hot, emb_ref[...],
                        preferred_element_type=jnp.float32)

    # + (positional encoding + conv bias + linear bias), prefolded.
    o_ref[0] = (acc + add_ref[...].astype(jnp.float32)).astype(o_ref.dtype)


def positional_encoding(L, d_model):
    position = jnp.arange(L, dtype=jnp.float32)[:, None]
    div_term = jnp.exp(jnp.arange(0, d_model, 2, dtype=jnp.float32)
                       * -(math.log(10000.0) / d_model))
    pe = jnp.zeros((L, d_model), jnp.float32)
    pe = pe.at[:, 0::2].set(jnp.sin(position * div_term))
    pe = pe.at[:, 1::2].set(jnp.cos(position * div_term))
    return pe


def custom_embedding(x, x_mark, params, seq_num, *,
                     compute_dtype=jnp.bfloat16,
                     out_dtype=None,
                     block_l=2048,
                     tile_budget_bytes=20 << 20):
    """Forward pass of CustomEmbedding (dropout in eval/identity mode)."""
    B, L, c_in = x.shape
    T = x_mark.shape[-1] - 1
    d_model = params["conv_w"].shape[0]
    out_dtype = compute_dtype if out_dtype is None else out_dtype
    add_dtype = compute_dtype   # f32 path stays exact; bf16 path halves stream

    # Lane-pad d_model to a multiple of 128 only when d_model is large enough
    # that the relative pad is small (keeps output stores lane-dense); tiny
    # d_model stays unpadded to avoid inflating the output writeback stream.
    if d_model % 128 != 0 and d_model >= 128:
        d_pad = ((d_model + 127) // 128) * 128
    else:
        d_pad = d_model

    def pad_d(a):
        if d_pad == d_model:
            return a
        return jnp.pad(a, [(0, 0)] * (a.ndim - 1) + [(0, d_pad - d_model)])

    # ---- wrapper-side glue (pure XLA, cheap) -------------------------------
    xc = x.astype(compute_dtype)
    x_prev = jnp.roll(xc, 1, axis=1)       # x[t-1], circular
    x_next = jnp.roll(xc, -1, axis=1)      # x[t+1], circular
    xm_temporal = x_mark[:, :, :T].astype(compute_dtype)
    # TODO(synk): for large c_in, pass x once (circularly padded) and build the
    # three shifts in-kernel instead of materializing a 3x-wide feats array.
    feats = jnp.concatenate([x_prev, xc, x_next, xm_temporal], axis=-1)
    K = feats.shape[-1]                    # 3*c_in + T

    seq_ids = x_mark[:, :, -1:].astype(jnp.int32)                  # (B, L, 1)

    # Stacked weight: rows match the feature concat order above.
    w_stack = pad_d(jnp.concatenate(
        [params["conv_w"][:, :, 0].T,      # x[t-1]
         params["conv_w"][:, :, 1].T,      # x[t]
         params["conv_w"][:, :, 2].T,      # x[t+1]
         params["lin_w"].T],               # temporal linear
        axis=0).astype(compute_dtype))     # (K, d_pad)
    emb = pad_d(params["emb"].astype(compute_dtype))           # (seq_num, d_pad)

    # Additive constants folded once: pe + conv bias + linear bias.
    add_tab = pad_d((positional_encoding(L, d_model)
                     + params["conv_b"][None, :]
                     + params["lin_b"][None, :]).astype(add_dtype))  # (L, d_pad)

    # ---- L-tile sizing: big tiles, double-buffered footprint under budget --
    cdt_size = jnp.dtype(compute_dtype).itemsize
    out_size = jnp.dtype(out_dtype).itemsize
    add_size = jnp.dtype(add_dtype).itemsize
    bytes_per_row = K * cdt_size + 4 + d_pad * (add_size + out_size)
    tl = min(block_l, L)
    while tl > 8 and 2 * tl * bytes_per_row > tile_budget_bytes:
        tl //= 2
    if tl < L:
        tl = max(8, (tl // 8) * 8)         # (8,128) tiling constraint
    num_l = pl.cdiv(L, tl)

    # Batch is the innermost grid axis so the (l, 0) add_tab block index stays
    # constant across consecutive steps (not re-fetched per batch element).
    # Leading (megacore) axis is the L-tile axis.
    grid = (num_l, B)

    w_bytes = w_stack.size * cdt_size
    emb_bytes = emb.size * cdt_size
    vmem_need = 2 * tl * bytes_per_row + 2 * (w_bytes + emb_bytes)
    vmem_limit = int(max(vmem_need + (4 << 20), 16 << 20))

    flops = 2 * B * L * (K + seq_num) * d_pad
    bytes_accessed = int(
        feats.size * cdt_size
        + seq_ids.size * 4
        + num_l * tl * d_pad * add_size    # add table fetched once per L tile
        + w_bytes + emb_bytes
        + B * L * d_pad * out_size)

    out = pl.pallas_call(
        _embed_kernel,
        out_shape=jax.ShapeDtypeStruct((B, L, d_pad), out_dtype),
        grid=grid,
        in_specs=[
            pl.BlockSpec((1, tl, K), lambda l, b: (b, l, 0)),
            pl.BlockSpec((1, tl, 1), lambda l, b: (b, l, 0)),
            pl.BlockSpec((tl, d_pad), lambda l, b: (l, 0)),
            pl.BlockSpec((K, d_pad), lambda l, b: (0, 0)),
            pl.BlockSpec((seq_num, d_pad), lambda l, b: (0, 0)),
        ],
        out_specs=pl.BlockSpec((1, tl, d_pad), lambda l, b: (b, l, 0)),
        compiler_params=pltpu.CompilerParams(
            dimension_semantics=("parallel", "parallel"),
            vmem_limit_bytes=vmem_limit),
        cost_estimate=pl.CostEstimate(flops=int(flops), transcendentals=0,
                                      bytes_accessed=bytes_accessed),
    )(feats, seq_ids, add_tab, w_stack, emb)

    if d_pad != d_model:
        out = out[..., :d_model]
    # TODO(synk): nn.Dropout(p=0.1) is applied as identity (eval/inference
    # mode); the training-mode stochastic mask is not reproduced.
    return out


def init_params(key, c_in, d_model, temporal_size, seq_num):
    k = jax.random.split(key, 5)
    fan_in = c_in * 3
    gain = math.sqrt(2.0 / (1.0 + 0.01 ** 2))   # kaiming_normal, leaky_relu
    conv_w = jax.random.normal(k[0], (d_model, c_in, 3), jnp.float32) * (
        gain / math.sqrt(fan_in))
    b_bound = 1.0 / math.sqrt(fan_in)
    conv_b = jax.random.uniform(k[1], (d_model,), jnp.float32, -b_bound, b_bound)
    l_bound = 1.0 / math.sqrt(temporal_size)
    lin_w = jax.random.uniform(k[2], (d_model, temporal_size), jnp.float32,
                               -l_bound, l_bound)
    lin_b = jax.random.uniform(k[3], (d_model,), jnp.float32, -l_bound, l_bound)
    emb = jax.random.normal(k[4], (seq_num, d_model), jnp.float32)
    return dict(conv_w=conv_w, conv_b=conv_b, lin_w=lin_w, lin_b=lin_b, emb=emb)


def reference(x, x_mark, params, seq_num):
    """Pure-JAX reference of CustomEmbedding.forward (eval mode, f32)."""
    B, L, c_in = x.shape
    d_model = params["conv_w"].shape[0]
    xp = jnp.concatenate([x[:, -1:], x, x[:, :1]], axis=1)        # circular pad
    windows = jnp.stack([xp[:, k:k + L] for k in range(3)], axis=-1)  # (B,L,c,3)
    conv = jnp.einsum("blck,ock->blo", windows, params["conv_w"]) + params["conv_b"]
    pe = positional_encoding(L, d_model)
    temp = x_mark[:, :, :-1] @ params["lin_w"].T + params["lin_b"]
    seqe = params["emb"][x_mark[:, :, -1].astype(jnp.int32)]
    return conv + pe[None] + temp + seqe


if __name__ == "__main__":
    B, L = 2, 8
    c_in, d_model = 4, 32
    temporal_size, seq_num = 5, 8

    key = jax.random.PRNGKey(0)
    kx, km, kid, kp = jax.random.split(key, 4)

    x = jax.random.normal(kx, (B, L, c_in), jnp.float32)
    x_mark_temp = jax.random.normal(km, (B, L, temporal_size), jnp.float32)
    seq_ids = jax.random.randint(kid, (B, L, 1), 0, seq_num).astype(jnp.float32)
    x_mark = jnp.concatenate([x_mark_temp, seq_ids], axis=-1)

    params = init_params(kp, c_in, d_model, temporal_size, seq_num)
    ref = reference(x, x_mark, params, seq_num)

    # Exactness check: f32 compute path (f32 output).
    out_f32 = jax.block_until_ready(
        custom_embedding(x, x_mark, params, seq_num,
                         compute_dtype=jnp.float32))
    assert out_f32.shape == (B, L, d_model)
    assert jnp.allclose(out_f32, ref, atol=1e-4, rtol=1e-4), (
        f"f32 max abs err {jnp.max(jnp.abs(out_f32 - ref))}")

    # Bandwidth-optimized path: bf16 operands, bf16 output, f32 accumulation.
    out_bf16 = jax.block_until_ready(
        custom_embedding(x, x_mark, params, seq_num,
                         compute_dtype=jnp.bfloat16))
    assert out_bf16.dtype == jnp.bfloat16
    assert jnp.allclose(out_bf16.astype(jnp.float32), ref,
                        atol=5e-2, rtol=5e-2), (
        f"bf16 max abs err {jnp.max(jnp.abs(out_bf16.astype(jnp.float32) - ref))}")

    # Partial-last-tile path: L not a multiple of the L tile.
    L2 = 12
    x2 = jax.random.normal(kx, (B, L2, c_in), jnp.float32)
    xm2 = jnp.concatenate(
        [jax.random.normal(km, (B, L2, temporal_size), jnp.float32),
         jax.random.randint(kid, (B, L2, 1), 0, seq_num).astype(jnp.float32)],
        axis=-1)
    ref2 = reference(x2, xm2, params, seq_num)
    out2 = jax.block_until_ready(
        custom_embedding(x2, xm2, params, seq_num,
                         compute_dtype=jnp.float32, block_l=8))
    assert jnp.allclose(out2, ref2, atol=1e-4, rtol=1e-4), (
        f"partial-tile max abs err {jnp.max(jnp.abs(out2 - ref2))}")

    print("KERNEL_OK")
</pallas_src>

<mosaic_0001>
module attributes {stable_mosaic.version = 11 : i64} {
  func.func @_embed_kernel(%arg0: i32, %arg1: i32, %arg2: memref<1x8x17xf32, #tpu.memory_space<vmem>>, %arg3: memref<1x8x1xi32, #tpu.memory_space<vmem>>, %arg4: memref<8x32xf32, #tpu.memory_space<vmem>>, %arg5: memref<17x32xf32, #tpu.memory_space<vmem>>, %arg6: memref<8x32xf32, #tpu.memory_space<vmem>>, %arg7: memref<1x8x32xf32, #tpu.memory_space<vmem>>) attributes {dimension_semantics = [#tpu.dimension_semantics<parallel>, #tpu.dimension_semantics<parallel>], iteration_bounds = array<i64: 1, 2>, scalar_prefetch = 0 : i64, scratch_operands = 0 : i64, tpu.core_type = #tpu.core_type<tc>, window_params = [{transform_indices = @transform_0, window_bounds = array<i64: 1, 8, 17>}, {transform_indices = @transform_1, window_bounds = array<i64: 1, 8, 1>}, {transform_indices = @transform_2, window_bounds = array<i64: 8, 32>}, {pipeline_mode = #tpu.pipeline_mode<synchronous>, transform_indices = @transform_3, window_bounds = array<i64: 17, 32>}, {pipeline_mode = #tpu.pipeline_mode<synchronous>, transform_indices = @transform_4, window_bounds = array<i64: 8, 32>}, {transform_indices = @transform_5, window_bounds = array<i64: 1, 8, 32>}]} {
    %c0 = arith.constant 0 : index
    %c0_0 = arith.constant 0 : index
    %c0_1 = arith.constant 0 : index
    %0 = vector.load %arg2[%c0, %c0_0, %c0_1] : memref<1x8x17xf32, #tpu.memory_space<vmem>>, vector<1x8x17xf32>
    %1 = vector.shape_cast %0 : vector<1x8x17xf32> to vector<8x17xf32>
    %c0_2 = arith.constant 0 : index
    %c0_3 = arith.constant 0 : index
    %2 = vector.load %arg5[%c0_2, %c0_3] : memref<17x32xf32, #tpu.memory_space<vmem>>, vector<17x32xf32>
    %cst = arith.constant dense<0.000000e+00> : vector<8x32xf32>
    %3 = tpu.matmul %1, %2, %cst {dimension_numbers = #tpu.dot_dimension_numbers<[1], [0], [0], [1], [0, 0, 1, 1], [], []>} : vector<8x17xf32>, vector<17x32xf32>, vector<8x32xf32> -> vector<8x32xf32>
    %4 = tpu.iota {dimensions = array<i32: 1>} : vector<8x8xi32>
    %c0_4 = arith.constant 0 : index
    %c0_5 = arith.constant 0 : index
    %c0_6 = arith.constant 0 : index
    %5 = vector.load %arg3[%c0_4, %c0_5, %c0_6] : memref<1x8x1xi32, #tpu.memory_space<vmem>>, vector<1x8x1xi32>
    %6 = vector.shape_cast %5 : vector<1x8x1xi32> to vector<8x1xi32>
    %7 = vector.broadcast %6 : vector<8x1xi32> to vector<8x8xi32>
    %8 = arith.cmpi eq, %4, %7 : vector<8x8xi32>
    %9 = arith.extui %8 : vector<8x8xi1> to vector<8x8xi32>
    %10 = arith.sitofp %9 : vector<8x8xi32> to vector<8x8xf32>
    %c0_7 = arith.constant 0 : index
    %c0_8 = arith.constant 0 : index
    %11 = vector.load %arg6[%c0_7, %c0_8] : memref<8x32xf32, #tpu.memory_space<vmem>>, vector<8x32xf32>
    %cst_9 = arith.constant dense<0.000000e+00> : vector<8x32xf32>
    %12 = tpu.matmul %10, %11, %cst_9 {dimension_numbers = #tpu.dot_dimension_numbers<[1], [0], [0], [1], [0, 0, 1, 1], [], []>} : vector<8x8xf32>, vector<8x32xf32>, vector<8x32xf32> -> vector<8x32xf32>
    %13 = arith.addf %3, %12 : vector<8x32xf32>
    %c0_10 = arith.constant 0 : index
    %c0_11 = arith.constant 0 : index
    %14 = vector.load %arg4[%c0_10, %c0_11] : memref<8x32xf32, #tpu.memory_space<vmem>>, vector<8x32xf32>
    %15 = arith.addf %13, %14 : vector<8x32xf32>
    %c0_12 = arith.constant 0 : index
    %c0_13 = arith.constant 0 : index
    %c0_14 = arith.constant 0 : index
    %16 = vector.load %arg7[%c0_12, %c0_13, %c0_14] : memref<1x8x32xf32, #tpu.memory_space<vmem>>, vector<1x8x32xf32>
    %17 = vector.shape_cast %16 : vector<1x8x32xf32> to vector<8x32xf32>
    %18 = vector.shape_cast %15 : vector<8x32xf32> to vector<1x8x32xf32>
    tpu.vector_store %arg7[%c0_12, %c0_13, %c0_14], %18 {strides = array<i32>} : memref<1x8x32xf32, #tpu.memory_space<vmem>>, vector<1x8x32xf32>,
    return
  }
  func.func @transform_0(%arg0: i32, %arg1: i32) -> (i32, i32, i32) {
    %c0_i32 = arith.constant 0 : i32
    %c0_i32_0 = arith.constant 0 : i32
    return %arg1, %arg0, %c0_i32 : i32, i32, i32
  }
  func.func @transform_1(%arg0: i32, %arg1: i32) -> (i32, i32, i32) {
    %c0_i32 = arith.constant 0 : i32
    %c0_i32_0 = arith.constant 0 : i32
    return %arg1, %arg0, %c0_i32 : i32, i32, i32
  }
  func.func @transform_2(%arg0: i32, %arg1: i32) -> (i32, i32) {
    %c0_i32 = arith.constant 0 : i32
    %c0_i32_0 = arith.constant 0 : i32
    return %arg0, %c0_i32 : i32, i32
  }
  func.func @transform_3(%arg0: i32, %arg1: i32) -> (i32, i32) {
    %c0_i32 = arith.constant 0 : i32
    %c0_i32_0 = arith.constant 0 : i32
    %c0_i32_1 = arith.constant 0 : i32
    return %c0_i32, %c0_i32_0 : i32, i32
  }
  func.func @transform_4(%arg0: i32, %arg1: i32) -> (i32, i32) {
    %c0_i32 = arith.constant 0 : i32
    %c0_i32_0 = arith.constant 0 : i32
    %c0_i32_1 = arith.constant 0 : i32
    return %c0_i32, %c0_i32_0 : i32, i32
  }
  func.func @transform_5(%arg0: i32, %arg1: i32) -> (i32, i32, i32) {
    %c0_i32 = arith.constant 0 : i32
    %c0_i32_0 = arith.constant 0 : i32
    return %arg1, %arg0, %c0_i32 : i32, i32, i32
  }
}

</mosaic_0001>

<llo_original>
// kernel: tpu_custom_call.1
$region0: #{tpu_custom_call.1}
  #allocation0 [shape = 'u32[]', space=smem, size = 0x4, offset = 0x4, fixed_abs, tag = 'smem constant byte address 0x4 - core index']
  #allocation1 [shape = 'u32[72,128]{1,0:T(1,128)}', space=vmem, size = 0x9000, scoped, tag = 'internal scratch']
  %s0 = inlined_call_operand.vmem [shape: f32[2,8,17], index: 0, kind: input, shape index: {}]
  %s1 = inlined_call_operand.vmem [shape: s32[2,8,1], index: 1, kind: input, shape index: {}]
  %s2 = inlined_call_operand.hbm [shape: f32[8,32], index: 2, kind: input, shape index: {}]
  %s3 = inlined_call_operand.hbm [shape: f32[17,32], index: 3, kind: input, shape index: {}]
  %s4 = inlined_call_operand.hbm [shape: f32[8,32], index: 4, kind: input, shape index: {}]
  %s5 = inlined_call_operand.hbm [shape: f32[2,8,32], index: 5, kind: output, shape index: {}]
  %s6 = sld [smem:[#allocation0]]
  $region65: #{tpu_custom_call.1} parent=0
    _
  %s8 = ssub.s32 1, %s6
  %s9 = scalar_select 0, %s8, %s6
  $region1: #{tpu_custom_call.1} parent=0
    #allocation2 [shape = 'u8[4096]{0}', space=vmem, size = 0x1000, scoped, tag = 'input window, operand 2, single buffered']
    #allocation3 [shape = 's32[2]{0}', space=sflag, size = 0x8, scoped, tag = 'scoped memory for tpu_custom_call.1']
    #allocation4 [shape = 's32[2]{0}', space=sflag, size = 0x8, scoped, tag = 'scoped memory for tpu_custom_call.1']
    #allocation5 [shape = 'u8[12288]{0}', space=vmem, size = 0x3000, scoped, tag = 'input window, operand 3, single buffered']
    #allocation6 [shape = 's32[1]{0}', space=sflag, size = 0x4, scoped, tag = 'scoped memory for tpu_custom_call.1']
    #allocation7 [shape = 'u8[4096]{0}', space=vmem, size = 0x1000, scoped, tag = 'input window, operand 4, single buffered']
    #allocation8 [shape = 'u8[8192]{0}', space=vmem, size = 0x2000, scoped, tag = 'output window, operand 0']
    %10 = vsyncpa [#allocation3], 0
    %11 = vsyncpa [#allocation6], 0
    %12 = vsyncpa [#allocation4], 0
    %s13 = scalar_lea.sflag [#allocation4], 1
    %14 = vsyncpa %s13, 0
    loop: start=0, step=1, limit=4
    $region2: #{tpu_custom_call.1} parent=1 // loop_pre_header
      _
    $region3: #{tpu_custom_call.1} parent=1 // loop_header
      %s16 = sphi 0, %s20
      %p17 = scmp.ge.s32.totalorder %s16, 4
      %s23 = sphi 0, %s35
      %s24 = sphi 0, %s31
      %s25 = sphi 0, %s23
      %s26 = sphi 0, %s24
      %s27 = sphi 0, %s25
      %s28 = sphi 0, %s26
      %s40 = sphi 0, %s42
      %s43 = sphi 0, %s40
      %s44 = sphi 0, %s43
      %s60 = sphi 0, %s44
      %s68 = sphi 0, %s70
      %s71 = sphi 0, %s68
      %s72 = sphi 0, %s71
      %s88 = sphi 0, %s72
      %s94 = sphi 0, %s96
      %s97 = sphi 0, %s94
      %s98 = sphi 0, %s97
      %s114 = sphi 0, %s98
      %s118 = sphi 0, %s118
      %s120 = sphi 0, %s118
      %s121 = sphi 0, %s120
      %s135 = sphi 0, %s121
      %s139 = sphi 0, %s139
      %s141 = sphi 0, %s139
      %s142 = sphi 0, %s141
      %s156 = sphi 0, %s142
      %s164 = sphi 0, %s166
      %s167 = sphi 0, %s164
      %s168 = sphi 0, %s167
      %s184 = sphi 0, %s168
    $region4: #{tpu_custom_call.1} parent=1 // loop_header_branch
      %19 = sbr.rel (%p17) target = $region8
    $region5: #{tpu_custom_call.1} parent=1 // loop_body
      %s21 = ssub.s32 %s16, 1
      %s22 = ssub.s32 %s16, 2
      %s29 = sadd.s32 1, %s24
      %p30 = scmp.ge.s32.totalorder %s29, 2
      %s31 = scalar_select %p30, 0, %s29
      %s32 = sadd.s32 1, %s23
      %s33 = scalar_select %p30, %s32, %s23
      %p34 = scmp.ge.s32.totalorder %s33, 1
      %s35 = scalar_select %p34, 0, %s33
      %s36 = ssub.s32 %s24, %s31
      %s37 = ssub.s32 %s23, %s35
      %s38 = sor.u32 %s36, %s37
      %p39 = scmp.eq.s32.totalorder %s38, 0
      %s41 = sadd.s32 %s40, 1
      %s42 = scalar_select %p39, %s40, %s41
      %p45 = pneg %p39
      %p46 = scmp.eq.s32.totalorder %s16, 1
      %p47 = por %p45, %p46
      %p48 = scmp.ne.s32.totalorder %s40, %s43
      %p49 = scmp.eq.s32.totalorder %s16, 0
      %p50 = por %p48, %p49
      %p51 = scmp.ne.s32.totalorder %s40, %s43
      %p52 = scmp.eq.s32.totalorder %s21, 1
      %p53 = por %p51, %p52
      %p54 = scmp.ne.s32.totalorder %s43, %s44
      %p55 = scmp.eq.s32.totalorder %s21, 0
      %p56 = por %p54, %p55
      %p57 = scmp.ne.s32.totalorder %s43, %s44
      %p58 = scmp.eq.s32.totalorder %s22, 1
      %p59 = por %p57, %p58
      %p61 = scmp.ne.s32.totalorder %s44, %s60
      %p62 = scmp.eq.s32.totalorder %s22, 0
      %p63 = por %p61, %p62
      %s64 = ssub.s32 %s24, %s31
      %s65 = ssub.s32 %s23, %s35
      %s66 = sor.u32 %s64, %s65
      %p67 = scmp.eq.s32.totalorder %s66, 0
      %s69 = sadd.s32 %s68, 1
      %s70 = scalar_select %p67, %s68, %s69
      %p73 = pneg %p67
      %p74 = scmp.eq.s32.totalorder %s16, 1
      %p75 = por %p73, %p74
      %p76 = scmp.ne.s32.totalorder %s68, %s71
      %p77 = scmp.eq.s32.totalorder %s16, 0
      %p78 = por %p76, %p77
      %p79 = scmp.ne.s32.totalorder %s68, %s71
      %p80 = scmp.eq.s32.totalorder %s21, 1
      %p81 = por %p79, %p80
      %p82 = scmp.ne.s32.totalorder %s71, %s72
      %p83 = scmp.eq.s32.totalorder %s21, 0
      %p84 = por %p82, %p83
      %p85 = scmp.ne.s32.totalorder %s71, %s72
      %p86 = scmp.eq.s32.totalorder %s22, 1
      %p87 = por %p85, %p86
      %p89 = scmp.ne.s32.totalorder %s72, %s88
      %p90 = scmp.eq.s32.totalorder %s22, 0
      %p91 = por %p89, %p90
      %s92 = ssub.s32 %s23, %s35
      %p93 = scmp.eq.s32.totalorder %s92, 0
      %s95 = sadd.s32 %s94, 1
      %s96 = scalar_select %p93, %s94, %s95
      %p99 = pneg %p93
      %p100 = scmp.eq.s32.totalorder %s16, 1
      %p101 = por %p99, %p100
      %p102 = scmp.ne.s32.totalorder %s94, %s97
      %p103 = scmp.eq.s32.totalorder %s16, 0
      %p104 = por %p102, %p103
      %p105 = scmp.ne.s32.totalorder %s94, %s97
      %p106 = scmp.eq.s32.totalorder %s21, 1
      %p107 = por %p105, %p106
      %p108 = scmp.ne.s32.totalorder %s97, %s98
      %p109 = scmp.eq.s32.totalorder %s21, 0
      %p110 = por %p108, %p109
      %p111 = scmp.ne.s32.totalorder %s97, %s98
      %p112 = scmp.eq.s32.totalorder %s22, 1
      %p113 = por %p111, %p112
      %p115 = scmp.ne.s32.totalorder %s98, %s114
      %p116 = scmp.eq.s32.totalorder %s22, 0
      %p117 = por %p115, %p116
      %s119 = sadd.s32 %s118, 1
      %p122 = scmp.eq.s32.totalorder %s16, 1
      %p123 = scmp.ne.s32.totalorder %s118, %s120
      %p124 = scmp.eq.s32.totalorder %s16, 0
      %p125 = por %p123, %p124
      %p126 = scmp.ne.s32.totalorder %s118, %s120
      %p127 = scmp.eq.s32.totalorder %s21, 1
      %p128 = por %p126, %p127
      %p129 = scmp.ne.s32.totalorder %s120, %s121
      %p130 = scmp.eq.s32.totalorder %s21, 0
      %p131 = por %p129, %p130
      %p132 = scmp.ne.s32.totalorder %s120, %s121
      %p133 = scmp.eq.s32.totalorder %s22, 1
      %p134 = por %p132, %p133
      %p136 = scmp.ne.s32.totalorder %s121, %s135
      %p137 = scmp.eq.s32.totalorder %s22, 0
      %p138 = por %p136, %p137
      %s140 = sadd.s32 %s139, 1
      %p143 = scmp.eq.s32.totalorder %s16, 1
      %p144 = scmp.ne.s32.totalorder %s139, %s141
      %p145 = scmp.eq.s32.totalorder %s16, 0
      %p146 = por %p144, %p145
      %p147 = scmp.ne.s32.totalorder %s139, %s141
      %p148 = scmp.eq.s32.totalorder %s21, 1
      %p149 = por %p147, %p148
      %p150 = scmp.ne.s32.totalorder %s141, %s142
      %p151 = scmp.eq.s32.totalorder %s21, 0
      %p152 = por %p150, %p151
      %p153 = scmp.ne.s32.totalorder %s141, %s142
      %p154 = scmp.eq.s32.totalorder %s22, 1
      %p155 = por %p153, %p154
      %p157 = scmp.ne.s32.totalorder %s142, %s156
      %p158 = scmp.eq.s32.totalorder %s22, 0
      %p159 = por %p157, %p158
      %s160 = ssub.s32 %s24, %s31
      %s161 = ssub.s32 %s23, %s35
      %s162 = sor.u32 %s160, %s161
      %p163 = scmp.eq.s32.totalorder %s162, 0
      %s165 = sadd.s32 %s164, 1
      %s166 = scalar_select %p163, %s164, %s165
      %p169 = pneg %p163
      %p170 = scmp.eq.s32.totalorder %s16, 1
      %p171 = por %p169, %p170
      %p172 = scmp.ne.s32.totalorder %s164, %s167
      %p173 = scmp.eq.s32.totalorder %s16, 0
      %p174 = por %p172, %p173
      %p175 = scmp.ne.s32.totalorder %s164, %s167
      %p176 = scmp.eq.s32.totalorder %s21, 1
      %p177 = por %p175, %p176
      %p178 = scmp.ne.s32.totalorder %s167, %s168
      %p179 = scmp.eq.s32.totalorder %s21, 0
      %p180 = por %p178, %p179
      %p181 = scmp.ne.s32.totalorder %s167, %s168
      %p182 = scmp.eq.s32.totalorder %s22, 1
      %p183 = por %p181, %p182
      %p185 = scmp.ne.s32.totalorder %s168, %s184
      %p186 = scmp.eq.s32.totalorder %s22, 0
      %p187 = por %p185, %p186
      %p188 = scmp.le.s32.totalorder 1, %s16
      %p189 = scmp.lt.s32.totalorder %s16, 3
      %p190 = pnand %p188, %p189
      %p191 = pneg %p190
      // Predicated region
      $region9: #{tpu_custom_call.1} parent=5 // pred_check
        _
      $region10: #{tpu_custom_call.1} parent=5 // pred_check_branch
        %193 = sbr.rel (%p190) target = $region12
      $region11: #{tpu_custom_call.1} parent=5 // pred_region
        %s194 = ssub.s32 %s16, 1
        // Predicated region
        $region13: #{tpu_custom_call.1} parent=11 // pred_check
          %p195 = pneg %p110
        $region14: #{tpu_custom_call.1} parent=11 // pred_check_branch
          %197 = sbr.rel (%p195) target = $region16
        $region15: #{tpu_custom_call.1} parent=11 // pred_region
          %199 = vsyncadd [#allocation3], 0
          %s200 = smul.addr %s25, 8
          %s201 = scalar_lea.hbm %s2, %s200
          %s203 = sshll.u32 %s201, 4
          %s204 = int_to_ptr.hbm [resolvable:$true] %s203
          %s205 = sshll.u32 [#allocation2], 4
          %s206 = int_to_ptr.vmem [resolvable:$true] %s205
          %208 = dma.hbm_to_vmem [thread:$0]  %s204, 128, %s206, [#allocation3]
        $region16: #{tpu_custom_call.1} parent=11 // pred_fallthru
          _
        // Predicated region
        $region17: #{tpu_custom_call.1} parent=11 // pred_check
          %p209 = pneg %p131
        $region18: #{tpu_custom_call.1} parent=11 // pred_check_branch
          %211 = sbr.rel (%p209) target = $region20
        $region19: #{tpu_custom_call.1} parent=11 // pred_region
          %213 = vsyncadd [#allocation6], 0
          %s214 = sshll.u32 %s3, 4
          %s215 = int_to_ptr.hbm [resolvable:$true] %s214
          %s216 = sshll.u32 [#allocation5], 4
          %s217 = int_to_ptr.vmem [resolvable:$true] %s216
          %222 = dma.hbm_to_vmem [thread:$0]  %s215, 384, %s217, [#allocation6], 128, 128, 8
        $region20: #{tpu_custom_call.1} parent=11 // pred_fallthru
          _
        // Predicated region
        $region21: #{tpu_custom_call.1} parent=11 // pred_check
          %p223 = pneg %p152
        $region22: #{tpu_custom_call.1} parent=11 // pred_check_branch
          %225 = sbr.rel (%p223) target = $region24
        $region23: #{tpu_custom_call.1} parent=11 // pred_region
          %227 = vsyncadd [#allocation6], 0
          %s229 = sshll.u32 %s4, 4
          %s230 = int_to_ptr.hbm [resolvable:$true] %s229
          %s231 = sshll.u32 [#allocation7], 4
          %s232 = int_to_ptr.vmem [resolvable:$true] %s231
          %234 = dma.hbm_to_vmem [thread:$0]  %s230, 128, %s232, [#allocation6]
        $region24: #{tpu_custom_call.1} parent=11 // pred_fallthru
          _
      $region12: #{tpu_custom_call.1} parent=5 // pred_fallthru
        _
      %p235 = scmp.lt.s32.totalorder %s16, 2
      // Predicated region
      $region25: #{tpu_custom_call.1} parent=5 // pred_check
        %p236 = pneg %p235
      $region26: #{tpu_custom_call.1} parent=5 // pred_check_branch
        %238 = sbr.rel (%p236) target = $region28
      $region27: #{tpu_custom_call.1} parent=5 // pred_region
        // Predicated region
        $region29: #{tpu_custom_call.1} parent=27 // pred_check
          %p239 = pneg %p50
        $region30: #{tpu_custom_call.1} parent=27 // pred_check_branch
          %241 = sbr.rel (%p239) target = $region32
        $region31: #{tpu_custom_call.1} parent=27 // pred_region
          %p242 = scmp.lt.s32.totalorder %s24, 1
          %s243 = scalar_select %p242, %s24, 1
          %p244 = scmp.lt.s32.totalorder %s23, 0
          %s245 = scalar_select %p244, %s23, 0
          %s246 = sadd.s32 %s245, %s243
          %s247 = smul.addr %s246, 8
          %s248 = scalar_lea.vmem %s0, %s247
        $region32: #{tpu_custom_call.1} parent=27 // pred_fallthru
          _
        // Predicated region
        $region33: #{tpu_custom_call.1} parent=27 // pred_check
          %p249 = pneg %p78
        $region34: #{tpu_custom_call.1} parent=27 // pred_check_branch
          %251 = sbr.rel (%p249) target = $region36
        $region35: #{tpu_custom_call.1} parent=27 // pred_region
          %p252 = scmp.lt.s32.totalorder %s24, 1
          %s253 = scalar_select %p252, %s24, 1
          %p254 = scmp.lt.s32.totalorder %s23, 0
          %s255 = scalar_select %p254, %s23, 0
          %s256 = sadd.s32 %s255, %s253
          %s257 = smul.addr %s256, 8
          %s258 = scalar_lea.vmem %s1, %s257
        $region36: #{tpu_custom_call.1} parent=27 // pred_fallthru
          _
      $region28: #{tpu_custom_call.1} parent=5 // pred_fallthru
        _
      %p259 = scmp.le.s32.totalorder 1, %s16
      %p260 = scmp.lt.s32.totalorder %s16, 3
      %p261 = pnand %p259, %p260
      %p262 = pneg %p261
      // Predicated region
      $region37: #{tpu_custom_call.1} parent=5 // pred_check
        _
      $region38: #{tpu_custom_call.1} parent=5 // pred_check_branch
        %264 = sbr.rel (%p261) target = $region40
      $region39: #{tpu_custom_call.1} parent=5 // pred_region
        %s265 = ssub.s32 %s16, 1
        // Predicated region
        $region41: #{tpu_custom_call.1} parent=39 // pred_check
          %p266 = pneg %p110
        $region42: #{tpu_custom_call.1} parent=39 // pred_check_branch
          %268 = sbr.rel (%p266) target = $region44
        $region43: #{tpu_custom_call.1} parent=39 // pred_region
          %270 = dma.done [#allocation3], 128
        $region44: #{tpu_custom_call.1} parent=39 // pred_fallthru
          _
        // Predicated region
        $region45: #{tpu_custom_call.1} parent=39 // pred_check
          %p271 = pneg %p131
        $region46: #{tpu_custom_call.1} parent=39 // pred_check_branch
          %273 = sbr.rel (%p271) target = $region48
        $region47: #{tpu_custom_call.1} parent=39 // pred_region
          %275 = dma.done [#allocation6], 384
        $region48: #{tpu_custom_call.1} parent=39 // pred_fallthru
          _
        // Predicated region
        $region49: #{tpu_custom_call.1} parent=39 // pred_check
          %p276 = pneg %p152
        $region50: #{tpu_custom_call.1} parent=39 // pred_check_branch
          %278 = sbr.rel (%p276) target = $region52
        $region51: #{tpu_custom_call.1} parent=39 // pred_region
          %280 = dma.done [#allocation6], 128
        $region52: #{tpu_custom_call.1} parent=39 // pred_fallthru
          _
        %p281 = scmp.lt.s32.totalorder %s26, 1
        %s282 = scalar_select %p281, %s26, 1
        %p283 = scmp.lt.s32.totalorder %s25, 0
        %s284 = scalar_select %p283, %s25, 0
        %s285 = sadd.s32 %s284, %s282
        %s286 = smul.addr %s285, 8
        %s287 = scalar_lea.vmem %s0, %s286
        %p288 = pneg %p56
        %p289 = pneg %p53
        %p290 = scmp.lt.s32.totalorder %s26, 1
        %s291 = scalar_select %p290, %s26, 1
        %p292 = scmp.lt.s32.totalorder %s25, 0
        %s293 = scalar_select %p292, %s25, 0
        %s294 = sadd.s32 %s293, %s291
        %s295 = smul.addr %s294, 8
        %s296 = scalar_lea.vmem %s1, %s295
        %p297 = pneg %p84
        %p298 = pneg %p81
        %p299 = pneg %p110
        %p300 = pneg %p107
        %p301 = pneg %p131
        %p302 = pneg %p128
        %p303 = pneg %p152
        %p304 = pneg %p149
        %p305 = pneg %p180
        %p306 = pneg %p177
        %s307 = sand.u32 %s167, 1
        %s308 = scalar_lea.sflag [#allocation4], %s307
        %s309 = sand.u32 %s167, 1
        %s310 = smul.addr %s309, 8
        %s311 = scalar_lea.vmem [#allocation8], %s310
        %p312 = scmp.lt.s32.totalorder %s26, 1
        %s313 = scalar_select %p312, %s26, 1
        %p314 = scmp.lt.s32.totalorder %s25, 0
        %s315 = scalar_select %p314, %s25, 0
        %s316 = sadd.s32 %s315, %s313
        %s317 = smul.addr %s316, 8
        %s318 = scalar_lea.vmem %s0, %s317
        %p319 = scmp.lt.s32.totalorder %s26, 1
        %s320 = scalar_select %p319, %s26, 1
        %p321 = scmp.lt.s32.totalorder %s25, 0
        %s322 = scalar_select %p321, %s25, 0
        %s323 = sadd.s32 %s322, %s320
        %s324 = smul.addr %s323, 8
        %s325 = scalar_lea.vmem %s1, %s324
        %v326 = vld [vmem:[%s318] sm:$0xff]
        %v327 = vld [vmem:[#allocation5] sm:$0xff]
        %v328 = vld [vmem:[#allocation5 + $0x8] sm:$0xff]
        %v329 = vld [vmem:[#allocation5 + $0x10] sm:$0x1]
        %v330 = vlaneseq
        %v331 = vand.u32 %v330, 127
        %v332 = vld [vmem:[%s325] sm:$0xff]
        %333 = vset.pattern.permute.xlu0 0
        %334 = vperm.xlu0 %333, %v332
        %v335 = vpop.permute.xlu0 %334
        %vm336 = vcmp.eq.s32.totalorder %v331, %v335
        %v337 = vsel %vm336, 1, 0
        %v338 = vcvt.s32.f32 %v337
        %v339 = vld [vmem:[#allocation7] sm:$0xff]
        %vm340 = vcmask 64512
        %v342 = vsel %vm340, %v338, 0
        %344 = vmatpush.msra.mxu0 0.0
        %345 = vmatpush.msra.mxu0 0.0
        %346 = vmatpush.msra.mxu0 0.0
        %347 = vmatpush.msra.mxu0 0.0
        %348 = vmatpush.msra.mxu0 0.0
        %349 = vmatpush.msra.mxu0 0.0
        %350 = vmatpush.msra.mxu0 0.0
        %351 = vmatpush.msra.mxu0 0.0
        %352 = vmatpush.msra.mxu0 0.0
        %353 = vmatpush.msra.mxu0 0.0
        %354 = vmatpush.msra.mxu0 0.0
        %355 = vmatpush.msra.mxu0 0.0
        %356 = vmatpush.msra.mxu0 0.0
        %357 = vmatpush.msra.mxu0 0.0
        %358 = vmatpush.msra.mxu0 0.0
        %359 = vmatpush.msra.mxu0 %v339
        %360 = vmatmul.f32.gmra.mxu0 %v342
        %v361 = vpop.f32.mrf.mxu0
        %v362 = vadd.f32 0.0, %v361
        %363 = vdwg.mxu0
        %vm364 = vcmask 138240
        %v366 = vsel %vm364, %v326, 0
        %vm368 = vcmask 1040384
        %v370 = vsel %vm368, %v329, 0
        %372 = vmatpush.msra.mxu0 0.0
        %373 = vmatpush.msra.mxu0 0.0
        %374 = vmatpush.msra.mxu0 0.0
        %375 = vmatpush.msra.mxu0 0.0
        %376 = vmatpush.msra.mxu0 0.0
        %377 = vmatpush.msra.mxu0 0.0
        %378 = vmatpush.msra.mxu0 0.0
        %379 = vmatpush.msra.mxu0 0.0
        %380 = vmatpush.msra.mxu0 0.0
        %381 = vmatpush.msra.mxu0 0.0
        %382 = vmatpush.msra.mxu0 0.0
        %383 = vmatpush.msra.mxu0 0.0
        %384 = vmatpush.msra.mxu0 0.0
        %385 = vmatpush.msra.mxu0 %v370
        %386 = vmatpush.msra.mxu0 %v328
        %387 = vmatpush.msra.mxu0 %v327
        %388 = vmatmul.f32.gmra.mxu0 %v366
        %v389 = vpop.f32.mrf.mxu0
        %v390 = vadd.f32 %v362, %v389
        %391 = vdwg.mxu0
        %v392 = vld [vmem:[#allocation2] sm:$0xff]
        %v393 = vadd.f32 %v390, %v392
        %vm394 = vcmask 261120
        %395 = vst.msk [vmem:[%s311] sm:$0xff] %vm394, %v393
        %s396 = sand.u32 %s167, 1
        %s397 = scalar_lea.sflag [#allocation4], %s396
        %s398 = sand.u32 %s167, 1
        %s399 = smul.addr %s398, 8
        %s400 = scalar_lea.vmem [#allocation8], %s399
        // Predicated region
        $region53: #{tpu_custom_call.1} parent=39 // pred_check
          %p401 = pneg %p177
        $region54: #{tpu_custom_call.1} parent=39 // pred_check_branch
          %403 = sbr.rel (%p401) target = $region56
        $region55: #{tpu_custom_call.1} parent=39 // pred_region
          %405 = vsyncadd %s397, 0
          %s406 = sadd.s32 %s25, %s26
          %s407 = smul.addr %s406, 8
          %s408 = scalar_lea.hbm %s5, %s407
          %s410 = sshll.u32 %s400, 4
          %s411 = int_to_ptr.vmem [resolvable:$true] %s410
          %s412 = sshll.u32 %s408, 4
          %s413 = int_to_ptr.hbm [resolvable:$true] %s412
          %415 = dma.vmem_to_hbm [thread:$0]  %s411, 128, %s413, %s397
        $region56: #{tpu_custom_call.1} parent=39 // pred_fallthru
          _
      $region40: #{tpu_custom_call.1} parent=5 // pred_fallthru
        _
      %p416 = scmp.le.s32.totalorder 2, %s16
      // Predicated region
      $region57: #{tpu_custom_call.1} parent=5 // pred_check
        %p417 = pneg %p416
      $region58: #{tpu_custom_call.1} parent=5 // pred_check_branch
        %419 = sbr.rel (%p417) target = $region60
      $region59: #{tpu_custom_call.1} parent=5 // pred_region
        %s420 = ssub.s32 %s16, 2
        // Predicated region
        $region61: #{tpu_custom_call.1} parent=59 // pred_check
          %p421 = pneg %p183
        $region62: #{tpu_custom_call.1} parent=59 // pred_check_branch
          %423 = sbr.rel (%p421) target = $region64
        $region63: #{tpu_custom_call.1} parent=59 // pred_region
          %s424 = sand.u32 %s168, 1
          %s425 = scalar_lea.sflag [#allocation4], %s424
          %s426 = sand.u32 %s168, 1
          %s427 = smul.addr %s426, 8
          %s428 = scalar_lea.vmem [#allocation8], %s427
          %430 = dma.done %s425, 128
        $region64: #{tpu_custom_call.1} parent=59 // pred_fallthru
          _
      $region60: #{tpu_custom_call.1} parent=5 // pred_fallthru
        _
    $region6: #{tpu_custom_call.1} parent=1 // loop_footer
      %s20 = sadd.s32 1, %s16
    $region7: #{tpu_custom_call.1} parent=1 // loop_footer_branch
      %15 = sbr.rel target = $region3
    $region8: #{tpu_custom_call.1} parent=1 // loop_exit
      _
    %431 = vsyncpa [#allocation3], 1
    %s432 = scalar_lea.sflag [#allocation3], 1
    %433 = vsyncpa %s432, 1
    %434 = vsyncpa [#allocation6], 1
    %435 = vsyncpa [#allocation4], 1
    %s436 = scalar_lea.sflag [#allocation4], 1
    %437 = vsyncpa %s436, 1

</llo_original>
